<compile_context>
chip_gen: v7x
topology: tpu7x:2x2x1
jax: 0.10.0
libtpu: 0.0.40
codegen_flags: <defaults>
</compile_context>

<pallas_src>
import functools

import jax
import jax.numpy as jnp
from jax.experimental import pallas as pl
from jax.experimental.pallas import tpu as pltpu


def _round_up(x, m):
    return (x + m - 1) // m * m


# ---------------------------------------------------------------------------
# Kernel 1:  HW2 = relu(A @ XW1 + b1) @ W2       (dropout = identity in eval)
# ---------------------------------------------------------------------------
def conv1_kernel(a_ref, xw_ref, b1_ref, w2_ref, out_ref, acc_ref):
    k = pl.program_id(1)

    @pl.when(k == 0)
    def _init():
        acc_ref[...] = jnp.zeros_like(acc_ref)

    acc_ref[...] += jnp.dot(a_ref[...], xw_ref[...],
                            preferred_element_type=jnp.float32)

    @pl.when(k == pl.num_programs(1) - 1)
    def _finalize():
        h = jnp.maximum(acc_ref[...] + b1_ref[...], 0.0)
        # TODO(synk): training-mode F.dropout (p=0.5) would need
        # pltpu.prng_seed + pltpu.stateful_bernoulli; eval mode is identity.
        out_ref[...] = jnp.dot(h.astype(jnp.bfloat16), w2_ref[...],
                               preferred_element_type=jnp.float32
                               ).astype(out_ref.dtype)


# ---------------------------------------------------------------------------
# Kernel 2:  out = log_softmax(A @ HW2 + b2)  (masked to the real class lanes)
# ---------------------------------------------------------------------------
def conv2_kernel(a_ref, hw_ref, b2_ref, out_ref, acc_ref, *, num_classes):
    k = pl.program_id(1)

    @pl.when(k == 0)
    def _init():
        acc_ref[...] = jnp.zeros_like(acc_ref)

    acc_ref[...] += jnp.dot(a_ref[...], hw_ref[...],
                            preferred_element_type=jnp.float32)

    @pl.when(k == pl.num_programs(1) - 1)
    def _finalize():
        z = acc_ref[...] + b2_ref[...]
        lane = jax.lax.broadcasted_iota(jnp.int32, z.shape, 1)
        zm = jnp.where(lane < num_classes, z, -jnp.inf)   # ignore padded lanes
        m = jnp.max(zm, axis=1, keepdims=True)
        lse = jnp.log(jnp.sum(jnp.exp(zm - m), axis=1, keepdims=True)) + m
        out_ref[...] = z - lse


def gnn_forward(adj_norm, x, w1, b1, w2, b2):
    N = x.shape[0]
    H = w1.shape[1]
    C = w2.shape[1]

    H_pad = _round_up(H, 128)
    C_pad = _round_up(C, 128)
    N_pad = _round_up(N, 128)

    # Tile sizes: rows TM (output tile), reduction TK (adjacency columns).
    TM = 256 if N_pad % 256 == 0 else 128
    if N_pad % 1024 == 0:
        TK = 1024
    elif N_pad % 512 == 0:
        TK = 512
    elif N_pad % 256 == 0:
        TK = 256
    else:
        TK = 128
    grid = (N_pad // TM, N_pad // TK)

    # --- tiny XLA-side prep: padding, bf16 casts, MXU-starved X@W1 (K=4) ---
    a_bf = jnp.pad(adj_norm.astype(jnp.float32),
                   ((0, N_pad - N), (0, N_pad - N))).astype(jnp.bfloat16)
    xw1 = jnp.dot(x, w1)                                        # (N, H)
    xw1_bf = jnp.pad(xw1, ((0, N_pad - N), (0, H_pad - H))).astype(jnp.bfloat16)
    b1_p = jnp.pad(b1.reshape(1, -1), ((0, 0), (0, H_pad - H))).astype(jnp.float32)
    w2_bf = jnp.pad(w2, ((0, H_pad - H), (0, C_pad - C))).astype(jnp.bfloat16)
    b2_p = jnp.pad(b2.reshape(1, -1), ((0, 0), (0, C_pad - C))).astype(jnp.float32)

    cparams = pltpu.CompilerParams(
        dimension_semantics=("parallel", "arbitrary"),
        vmem_limit_bytes=32 * 1024 * 1024)

    # Layer 1 (A @ XW1 + b1, relu) fused with the H @ W2 projection.
    hw2 = pl.pallas_call(
        conv1_kernel,
        out_shape=jax.ShapeDtypeStruct((N_pad, C_pad), jnp.bfloat16),
        grid=grid,
        in_specs=[
            pl.BlockSpec((TM, TK), lambda i, k: (i, k)),        # adjacency tile
            pl.BlockSpec((TK, H_pad), lambda i, k: (k, 0)),     # XW1 slab
            pl.BlockSpec((1, H_pad), lambda i, k: (0, 0)),      # b1 (resident)
            pl.BlockSpec((H_pad, C_pad), lambda i, k: (0, 0)),  # W2 (resident)
        ],
        out_specs=pl.BlockSpec((TM, C_pad), lambda i, k: (i, 0)),
        scratch_shapes=[pltpu.VMEM((TM, H_pad), jnp.float32)],
        compiler_params=cparams,
    )(a_bf, xw1_bf, b1_p, w2_bf)

    # Layer 2: A @ HW2 + b2, masked log_softmax, lane-dense f32 output.
    out_p = pl.pallas_call(
        functools.partial(conv2_kernel, num_classes=C),
        out_shape=jax.ShapeDtypeStruct((N_pad, C_pad), jnp.float32),
        grid=grid,
        in_specs=[
            pl.BlockSpec((TM, TK), lambda i, k: (i, k)),        # adjacency tile
            pl.BlockSpec((TK, C_pad), lambda i, k: (k, 0)),     # HW2 slab
            pl.BlockSpec((1, C_pad), lambda i, k: (0, 0)),      # b2 (resident)
        ],
        out_specs=pl.BlockSpec((TM, C_pad), lambda i, k: (i, 0)),
        scratch_shapes=[pltpu.VMEM((TM, C_pad), jnp.float32)],
        compiler_params=cparams,
    )(a_bf, hw2, b2_p)

    return out_p[:N, :C]


def build_norm_adj(num_nodes, src, dst):
    """Symmetrically-normalized adjacency, DGL GraphConv norm='both'."""
    adj = jnp.zeros((num_nodes, num_nodes), jnp.float32)
    adj = adj.at[dst, src].add(1.0)           # message flows src -> dst
    deg_in = jnp.clip(adj.sum(axis=1), 1.0)   # in-degree  (dst norm)
    deg_out = jnp.clip(adj.sum(axis=0), 1.0)  # out-degree (src norm)
    d_in = 1.0 / jnp.sqrt(deg_in)
    d_out = 1.0 / jnp.sqrt(deg_out)
    return d_in[:, None] * adj * d_out[None, :]


def reference_forward_f32(adj_norm, x, w1, b1, w2, b2):
    h = jnp.maximum(adj_norm @ (x @ w1) + b1, 0.0)
    z = adj_norm @ (h @ w2) + b2
    return jax.nn.log_softmax(z, axis=1)


def reference_forward_bf16path(adj_norm, x, w1, b1, w2, b2):
    """Mirrors the kernel's deliberate bf16 operand casts (f32 accumulation)."""
    q = lambda t: t.astype(jnp.bfloat16).astype(jnp.float32)
    a = q(adj_norm)
    xw1 = q(x @ w1)
    h = jnp.maximum(a @ xw1 + b1, 0.0)
    hw2 = q(q(h) @ q(w2))
    z = a @ hw2 + b2
    return jax.nn.log_softmax(z, axis=1)


if __name__ == "__main__":
    # Small, deterministic problem: 16-node bidirectional ring graph,
    # in_feats=4, hidden_size=16, num_classes=2.
    N, in_feats, hidden_size, num_classes = 16, 4, 16, 2

    key = jax.random.PRNGKey(0)
    k_x, k_w1, k_b1, k_w2, k_b2 = jax.random.split(key, 5)

    x = jax.random.normal(k_x, (N, in_feats), jnp.float32)
    w1 = jax.random.normal(k_w1, (in_feats, hidden_size), jnp.float32) * 0.5
    b1 = jax.random.normal(k_b1, (hidden_size,), jnp.float32) * 0.1
    w2 = jax.random.normal(k_w2, (hidden_size, num_classes), jnp.float32) * 0.5
    b2 = jax.random.normal(k_b2, (num_classes,), jnp.float32) * 0.1

    nodes = jnp.arange(N)
    src = jnp.concatenate([nodes, (nodes + 1) % N])
    dst = jnp.concatenate([(nodes + 1) % N, nodes])
    adj_norm = build_norm_adj(N, src, dst)

    out = jax.jit(gnn_forward)(adj_norm, x, w1, b1, w2, b2)
    out = jax.block_until_ready(out)

    ref_q = reference_forward_bf16path(adj_norm, x, w1, b1, w2, b2)
    ref_f = reference_forward_f32(adj_norm, x, w1, b1, w2, b2)

    assert out.shape == (N, num_classes)
    assert jnp.allclose(out, ref_q, atol=2e-2, rtol=2e-2), "mismatch vs bf16-path reference"
    assert jnp.allclose(out, ref_f, atol=6e-2, rtol=6e-2), "mismatch vs f32 reference"

    print("KERNEL_OK")
</pallas_src>

<mosaic_0001>
module attributes {stable_mosaic.version = 11 : i64} {
  func.func @conv2_kernel(%arg0: i32, %arg1: i32, %arg2: memref<128x128xbf16, #tpu.memory_space<vmem>>, %arg3: memref<128x128xbf16, #tpu.memory_space<vmem>>, %arg4: memref<1x128xf32, #tpu.memory_space<vmem>>, %arg5: memref<128x128xf32, #tpu.memory_space<vmem>>, %arg6: memref<128x128xf32, #tpu.memory_space<vmem>>) attributes {dimension_semantics = [#tpu.dimension_semantics<parallel>, #tpu.dimension_semantics<arbitrary>], iteration_bounds = array<i64: 1, 1>, scalar_prefetch = 0 : i64, scratch_operands = 1 : i64, tpu.core_type = #tpu.core_type<tc>, window_params = [{transform_indices = @transform_0, window_bounds = array<i64: 128, 128>}, {transform_indices = @transform_1, window_bounds = array<i64: 128, 128>}, {pipeline_mode = #tpu.pipeline_mode<synchronous>, transform_indices = @transform_2, window_bounds = array<i64: 1, 128>}, {transform_indices = @transform_3, window_bounds = array<i64: 128, 128>}]} {
    %c0_i32 = arith.constant 0 : i32
    %0 = arith.cmpi eq, %arg1, %c0_i32 : i32
    %1 = arith.extui %0 : i1 to i32
    %c0_i32_0 = arith.constant 0 : i32
    %2 = arith.cmpi ne, %1, %c0_i32_0 : i32
    scf.if %2 {
      %cst_10 = arith.constant 0.000000e+00 : f32
      %12 = vector.broadcast %cst_10 : f32 to vector<128x128xf32>
      %c0_11 = arith.constant 0 : index
      %c0_12 = arith.constant 0 : index
      %13 = vector.load %arg6[%c0_11, %c0_12] : memref<128x128xf32, #tpu.memory_space<vmem>>, vector<128x128xf32>
      tpu.vector_store %arg6[%c0_11, %c0_12], %12 {strides = array<i32>} : memref<128x128xf32, #tpu.memory_space<vmem>>, vector<128x128xf32>,
    } else {
    }
    %c0 = arith.constant 0 : index
    %c0_1 = arith.constant 0 : index
    %3 = vector.load %arg6[%c0, %c0_1] : memref<128x128xf32, #tpu.memory_space<vmem>>, vector<128x128xf32>
    %c0_2 = arith.constant 0 : index
    %c0_3 = arith.constant 0 : index
    %4 = vector.load %arg2[%c0_2, %c0_3] : memref<128x128xbf16, #tpu.memory_space<vmem>>, vector<128x128xbf16>
    %c0_4 = arith.constant 0 : index
    %c0_5 = arith.constant 0 : index
    %5 = vector.load %arg3[%c0_4, %c0_5] : memref<128x128xbf16, #tpu.memory_space<vmem>>, vector<128x128xbf16>
    %cst = arith.constant dense<0.000000e+00> : vector<128x128xf32>
    %6 = tpu.matmul %4, %5, %cst {dimension_numbers = #tpu.dot_dimension_numbers<[1], [0], [0], [1], [0, 0, 1, 1], [], []>} : vector<128x128xbf16>, vector<128x128xbf16>, vector<128x128xf32> -> vector<128x128xf32>
    %7 = arith.addf %3, %6 : vector<128x128xf32>
    %c0_6 = arith.constant 0 : index
    %c0_7 = arith.constant 0 : index
    %8 = vector.load %arg6[%c0_6, %c0_7] : memref<128x128xf32, #tpu.memory_space<vmem>>, vector<128x128xf32>
    tpu.vector_store %arg6[%c0_6, %c0_7], %7 {strides = array<i32>} : memref<128x128xf32, #tpu.memory_space<vmem>>, vector<128x128xf32>,
    %c0_i32_8 = arith.constant 0 : i32
    %9 = arith.cmpi eq, %arg1, %c0_i32_8 : i32
    %10 = arith.extui %9 : i1 to i32
    %c0_i32_9 = arith.constant 0 : i32
    %11 = arith.cmpi ne, %10, %c0_i32_9 : i32
    scf.if %11 {
      %c0_10 = arith.constant 0 : index
      %c0_11 = arith.constant 0 : index
      %12 = vector.load %arg6[%c0_10, %c0_11] : memref<128x128xf32, #tpu.memory_space<vmem>>, vector<128x128xf32>
      %c0_12 = arith.constant 0 : index
      %c0_13 = arith.constant 0 : index
      %13 = vector.load %arg4[%c0_12, %c0_13] : memref<1x128xf32, #tpu.memory_space<vmem>>, vector<1x128xf32>
      %14 = vector.broadcast %13 : vector<1x128xf32> to vector<128x128xf32>
      %15 = arith.addf %12, %14 : vector<128x128xf32>
      %16 = tpu.iota {dimensions = array<i32: 1>} : vector<128x128xi32>
      %c2_i32 = arith.constant 2 : i32
      %17 = vector.broadcast %c2_i32 : i32 to vector<128x128xi32>
      %18 = arith.cmpi slt, %16, %17 : vector<128x128xi32>
      %cst_14 = arith.constant 0xFF800000 : f32
      %19 = vector.broadcast %cst_14 : f32 to vector<128x128xf32>
      %20 = arith.select %18, %15, %19 : vector<128x128xi1>, vector<128x128xf32>
      %cst_15 = arith.constant dense<0xFF800000> : vector<128xf32>
      %21 = vector.multi_reduction <maximumf>, %20, %cst_15 [1] : vector<128x128xf32> to vector<128xf32>
      %22 = vector.shape_cast %21 : vector<128xf32> to vector<128x1xf32>
      %23 = vector.broadcast %22 : vector<128x1xf32> to vector<128x128xf32>
      %24 = arith.subf %20, %23 : vector<128x128xf32>
      %25 = math.exp %24 : vector<128x128xf32>
      %cst_16 = arith.constant dense<0.000000e+00> : vector<128xf32>
      %26 = vector.multi_reduction <add>, %25, %cst_16 [1] : vector<128x128xf32> to vector<128xf32>
      %27 = vector.shape_cast %26 : vector<128xf32> to vector<128x1xf32>
      %28 = math.log %27 : vector<128x1xf32>
      %29 = arith.addf %28, %22 : vector<128x1xf32>
      %30 = vector.broadcast %29 : vector<128x1xf32> to vector<128x128xf32>
      %31 = arith.subf %15, %30 : vector<128x128xf32>
      %c0_17 = arith.constant 0 : index
      %c0_18 = arith.constant 0 : index
      %32 = vector.load %arg5[%c0_17, %c0_18] : memref<128x128xf32, #tpu.memory_space<vmem>>, vector<128x128xf32>
      tpu.vector_store %arg5[%c0_17, %c0_18], %31 {strides = array<i32>} : memref<128x128xf32, #tpu.memory_space<vmem>>, vector<128x128xf32>,
    } else {
    }
    return
  }
  func.func @transform_0(%arg0: i32, %arg1: i32) -> (i32, i32) {
    %c0_i32 = arith.constant 0 : i32
    return %arg0, %arg1 : i32, i32
  }
  func.func @transform_1(%arg0: i32, %arg1: i32) -> (i32, i32) {
    %c0_i32 = arith.constant 0 : i32
    %c0_i32_0 = arith.constant 0 : i32
    return %arg1, %c0_i32 : i32, i32
  }
  func.func @transform_2(%arg0: i32, %arg1: i32) -> (i32, i32) {
    %c0_i32 = arith.constant 0 : i32
    %c0_i32_0 = arith.constant 0 : i32
    %c0_i32_1 = arith.constant 0 : i32
    return %c0_i32, %c0_i32_0 : i32, i32
  }
  func.func @transform_3(%arg0: i32, %arg1: i32) -> (i32, i32) {
    %c0_i32 = arith.constant 0 : i32
    %c0_i32_0 = arith.constant 0 : i32
    return %arg0, %c0_i32 : i32, i32
  }
}

module attributes {stable_mosaic.version = 11 : i64} {
  func.func @conv1_kernel(%arg0: i32, %arg1: i32, %arg2: memref<128x128xbf16, #tpu.memory_space<vmem>>, %arg3: memref<128x128xbf16, #tpu.memory_space<vmem>>, %arg4: memref<1x128xf32, #tpu.memory_space<vmem>>, %arg5: memref<128x128xbf16, #tpu.memory_space<vmem>>, %arg6: memref<128x128xbf16, #tpu.memory_space<vmem>>, %arg7: memref<128x128xf32, #tpu.memory_space<vmem>>) attributes {dimension_semantics = [#tpu.dimension_semantics<parallel>, #tpu.dimension_semantics<arbitrary>], iteration_bounds = array<i64: 1, 1>, scalar_prefetch = 0 : i64, scratch_operands = 1 : i64, tpu.core_type = #tpu.core_type<tc>, window_params = [{transform_indices = @transform_0, window_bounds = array<i64: 128, 128>}, {transform_indices = @transform_1, window_bounds = array<i64: 128, 128>}, {pipeline_mode = #tpu.pipeline_mode<synchronous>, transform_indices = @transform_2, window_bounds = array<i64: 1, 128>}, {pipeline_mode = #tpu.pipeline_mode<synchronous>, transform_indices = @transform_3, window_bounds = array<i64: 128, 128>}, {transform_indices = @transform_4, window_bounds = array<i64: 128, 128>}]} {
    %c0_i32 = arith.constant 0 : i32
    %0 = arith.cmpi eq, %arg1, %c0_i32 : i32
    %1 = arith.extui %0 : i1 to i32
    %c0_i32_0 = arith.constant 0 : i32
    %2 = arith.cmpi ne, %1, %c0_i32_0 : i32
    scf.if %2 {
      %cst_10 = arith.constant 0.000000e+00 : f32
      %12 = vector.broadcast %cst_10 : f32 to vector<128x128xf32>
      %c0_11 = arith.constant 0 : index
      %c0_12 = arith.constant 0 : index
      %13 = vector.load %arg7[%c0_11, %c0_12] : memref<128x128xf32, #tpu.memory_space<vmem>>, vector<128x128xf32>
      tpu.vector_store %arg7[%c0_11, %c0_12], %12 {strides = array<i32>} : memref<128x128xf32, #tpu.memory_space<vmem>>, vector<128x128xf32>,
    } else {
    }
    %c0 = arith.constant 0 : index
    %c0_1 = arith.constant 0 : index
    %3 = vector.load %arg7[%c0, %c0_1] : memref<128x128xf32, #tpu.memory_space<vmem>>, vector<128x128xf32>
    %c0_2 = arith.constant 0 : index
    %c0_3 = arith.constant 0 : index
    %4 = vector.load %arg2[%c0_2, %c0_3] : memref<128x128xbf16, #tpu.memory_space<vmem>>, vector<128x128xbf16>
    %c0_4 = arith.constant 0 : index
    %c0_5 = arith.constant 0 : index
    %5 = vector.load %arg3[%c0_4, %c0_5] : memref<128x128xbf16, #tpu.memory_space<vmem>>, vector<128x128xbf16>
    %cst = arith.constant dense<0.000000e+00> : vector<128x128xf32>
    %6 = tpu.matmul %4, %5, %cst {dimension_numbers = #tpu.dot_dimension_numbers<[1], [0], [0], [1], [0, 0, 1, 1], [], []>} : vector<128x128xbf16>, vector<128x128xbf16>, vector<128x128xf32> -> vector<128x128xf32>
    %7 = arith.addf %3, %6 : vector<128x128xf32>
    %c0_6 = arith.constant 0 : index
    %c0_7 = arith.constant 0 : index
    %8 = vector.load %arg7[%c0_6, %c0_7] : memref<128x128xf32, #tpu.memory_space<vmem>>, vector<128x128xf32>
    tpu.vector_store %arg7[%c0_6, %c0_7], %7 {strides = array<i32>} : memref<128x128xf32, #tpu.memory_space<vmem>>, vector<128x128xf32>,
    %c0_i32_8 = arith.constant 0 : i32
    %9 = arith.cmpi eq, %arg1, %c0_i32_8 : i32
    %10 = arith.extui %9 : i1 to i32
    %c0_i32_9 = arith.constant 0 : i32
    %11 = arith.cmpi ne, %10, %c0_i32_9 : i32
    scf.if %11 {
      %c0_10 = arith.constant 0 : index
      %c0_11 = arith.constant 0 : index
      %12 = vector.load %arg7[%c0_10, %c0_11] : memref<128x128xf32, #tpu.memory_space<vmem>>, vector<128x128xf32>
      %c0_12 = arith.constant 0 : index
      %c0_13 = arith.constant 0 : index
      %13 = vector.load %arg4[%c0_12, %c0_13] : memref<1x128xf32, #tpu.memory_space<vmem>>, vector<1x128xf32>
      %14 = vector.broadcast %13 : vector<1x128xf32> to vector<128x128xf32>
      %15 = arith.addf %12, %14 : vector<128x128xf32>
      %cst_14 = arith.constant 0.000000e+00 : f32
      %16 = vector.broadcast %cst_14 : f32 to vector<128x128xf32>
      %17 = arith.maximumf %15, %16 : vector<128x128xf32>
      %18 = arith.truncf %17 : vector<128x128xf32> to vector<128x128xbf16>
      %c0_15 = arith.constant 0 : index
      %c0_16 = arith.constant 0 : index
      %19 = vector.load %arg5[%c0_15, %c0_16] : memref<128x128xbf16, #tpu.memory_space<vmem>>, vector<128x128xbf16>
      %cst_17 = arith.constant dense<0.000000e+00> : vector<128x128xf32>
      %20 = tpu.matmul %18, %19, %cst_17 {dimension_numbers = #tpu.dot_dimension_numbers<[1], [0], [0], [1], [0, 0, 1, 1], [], []>} : vector<128x128xbf16>, vector<128x128xbf16>, vector<128x128xf32> -> vector<128x128xf32>
      %21 = arith.truncf %20 : vector<128x128xf32> to vector<128x128xbf16>
      %c0_18 = arith.constant 0 : index
      %c0_19 = arith.constant 0 : index
      %22 = vector.load %arg6[%c0_18, %c0_19] : memref<128x128xbf16, #tpu.memory_space<vmem>>, vector<128x128xbf16>
      tpu.vector_store %arg6[%c0_18, %c0_19], %21 {strides = array<i32>} : memref<128x128xbf16, #tpu.memory_space<vmem>>, vector<128x128xbf16>,
    } else {
    }
    return
  }
  func.func @transform_0(%arg0: i32, %arg1: i32) -> (i32, i32) {
    %c0_i32 = arith.constant 0 : i32
    return %arg0, %arg1 : i32, i32
  }
  func.func @transform_1(%arg0: i32, %arg1: i32) -> (i32, i32) {
    %c0_i32 = arith.constant 0 : i32
    %c0_i32_0 = arith.constant 0 : i32
    return %arg1, %c0_i32 : i32, i32
  }
  func.func @transform_2(%arg0: i32, %arg1: i32) -> (i32, i32) {
    %c0_i32 = arith.constant 0 : i32
    %c0_i32_0 = arith.constant 0 : i32
    %c0_i32_1 = arith.constant 0 : i32
    return %c0_i32, %c0_i32_0 : i32, i32
  }
  func.func @transform_3(%arg0: i32, %arg1: i32) -> (i32, i32) {
    %c0_i32 = arith.constant 0 : i32
    %c0_i32_0 = arith.constant 0 : i32
    %c0_i32_1 = arith.constant 0 : i32
    return %c0_i32, %c0_i32_0 : i32, i32
  }
  func.func @transform_4(%arg0: i32, %arg1: i32) -> (i32, i32) {
    %c0_i32 = arith.constant 0 : i32
    %c0_i32_0 = arith.constant 0 : i32
    return %arg0, %c0_i32 : i32, i32
  }
}

</mosaic_0001>

<llo_original>
// kernel: gnn_forward.3
$region0: #{gnn_forward.3}
  #allocation0 [shape = 'u32[]', space=smem, size = 0x4, offset = 0x4, fixed_abs, tag = 'smem constant byte address 0x4 - core index']
  #allocation1 [shape = 'u32[144,128]{1,0:T(1,128)}', space=vmem, size = 0x12000, scoped, tag = 'internal scratch']
  #allocation2 [shape = 'f32[128,128]{1,0:T(8,128)}', space=vmem, size = 0x10000, scoped, tag = 'scratch operand']
  %s0 = inlined_call_operand.vmem [shape: bf16[128,128], index: 0, kind: input, shape index: {}]
  %s1 = inlined_call_operand.vmem [shape: bf16[128,128], index: 1, kind: input, shape index: {}]
  %s2 = inlined_call_operand.vmem [shape: f32[1,128], index: 2, kind: input, shape index: {}]
  %s3 = inlined_call_operand.vmem [shape: f32[128,128], index: 3, kind: output, shape index: {}]
  %s4 = sld [smem:[#allocation0]]
  $region30: #{gnn_forward.3} parent=0
    _
  %s6 = ssub.s32 1, %s4
  %s7 = scalar_select 0, %s6, %s4
  // Predicated region
  $region2: #{gnn_forward.3} parent=0 // pred_check
    _
  $region3: #{gnn_forward.3} parent=0 // pred_check_branch
    %9 = sbr.rel (0) target = $region5
  $region4: #{gnn_forward.3} parent=0 // pred_region
    _
  $region5: #{gnn_forward.3} parent=0 // pred_fallthru
    _
  // Predicated region
  $region6: #{gnn_forward.3} parent=0 // pred_check
    _
  $region7: #{gnn_forward.3} parent=0 // pred_check_branch
    %11 = sbr.rel (0) target = $region9
  $region8: #{gnn_forward.3} parent=0 // pred_region
    _
  $region9: #{gnn_forward.3} parent=0 // pred_fallthru
    _
  // Predicated region
  $region10: #{gnn_forward.3} parent=0 // pred_check
    _
  $region11: #{gnn_forward.3} parent=0 // pred_check_branch
    %13 = sbr.rel (0) target = $region13
  $region12: #{gnn_forward.3} parent=0 // pred_region
    _
  $region13: #{gnn_forward.3} parent=0 // pred_fallthru
    _
  %p15 = scmp.eq.s32.totalorder 0, 0
  // Predicated region
  $region14: #{gnn_forward.3} parent=0 // pred_check
    %p16 = pneg %p15
  $region15: #{gnn_forward.3} parent=0 // pred_check_branch
    %18 = sbr.rel (%p16) target = $region17
  $region16: #{gnn_forward.3} parent=0 // pred_region
    %19 = vst [vmem:[#allocation2] sm:$0xff] 0.0
    %20 = vst [vmem:[#allocation2 + $0x8] sm:$0xff] 0.0
    %21 = vst [vmem:[#allocation2 + $0x10] sm:$0xff] 0.0
    %22 = vst [vmem:[#allocation2 + $0x18] sm:$0xff] 0.0
    %23 = vst [vmem:[#allocation2 + $0x20] sm:$0xff] 0.0
    %24 = vst [vmem:[#allocation2 + $0x28] sm:$0xff] 0.0
    %25 = vst [vmem:[#allocation2 + $0x30] sm:$0xff] 0.0
    %26 = vst [vmem:[#allocation2 + $0x38] sm:$0xff] 0.0
    %27 = vst [vmem:[#allocation2 + $0x40] sm:$0xff] 0.0
    %28 = vst [vmem:[#allocation2 + $0x48] sm:$0xff] 0.0
    %29 = vst [vmem:[#allocation2 + $0x50] sm:$0xff] 0.0
    %30 = vst [vmem:[#allocation2 + $0x58] sm:$0xff] 0.0
    %31 = vst [vmem:[#allocation2 + $0x60] sm:$0xff] 0.0
    %32 = vst [vmem:[#allocation2 + $0x68] sm:$0xff] 0.0
    %33 = vst [vmem:[#allocation2 + $0x70] sm:$0xff] 0.0
    %34 = vst [vmem:[#allocation2 + $0x78] sm:$0xff] 0.0
  $region17: #{gnn_forward.3} parent=0 // pred_fallthru
    _
  %v35 = vld [vmem:[#allocation2] sm:$0xff]
  %v36 = vld [vmem:[#allocation2 + $0x8] sm:$0xff]
  %v37 = vld [vmem:[#allocation2 + $0x10] sm:$0xff]
  %v38 = vld [vmem:[#allocation2 + $0x18] sm:$0xff]
  %v39 = vld [vmem:[#allocation2 + $0x20] sm:$0xff]
  %v40 = vld [vmem:[#allocation2 + $0x28] sm:$0xff]
  %v41 = vld [vmem:[#allocation2 + $0x30] sm:$0xff]
  %v42 = vld [vmem:[#allocation2 + $0x38] sm:$0xff]
  %v43 = vld [vmem:[#allocation2 + $0x40] sm:$0xff]
  %v44 = vld [vmem:[#allocation2 + $0x48] sm:$0xff]
  %v45 = vld [vmem:[#allocation2 + $0x50] sm:$0xff]
  %v46 = vld [vmem:[#allocation2 + $0x58] sm:$0xff]
  %v47 = vld [vmem:[#allocation2 + $0x60] sm:$0xff]
  %v48 = vld [vmem:[#allocation2 + $0x68] sm:$0xff]
  %v49 = vld [vmem:[#allocation2 + $0x70] sm:$0xff]
  %v50 = vld [vmem:[#allocation2 + $0x78] sm:$0xff]
  %v51 = vld [vmem:[%s0] sm:$0xf]
  %v52 = vld [vmem:[%s0 + $0x4] sm:$0xf]
  %v53 = vld [vmem:[%s0 + $0x8] sm:$0xf]
  %v54 = vld [vmem:[%s0 + $0xc] sm:$0xf]
  %v55 = vld [vmem:[%s0 + $0x10] sm:$0xf]
  %v56 = vld [vmem:[%s0 + $0x14] sm:$0xf]
  %v57 = vld [vmem:[%s0 + $0x18] sm:$0xf]
  %v58 = vld [vmem:[%s0 + $0x1c] sm:$0xf]
  %v59 = vld [vmem:[%s0 + $0x20] sm:$0xf]
  %v60 = vld [vmem:[%s0 + $0x24] sm:$0xf]
  %v61 = vld [vmem:[%s0 + $0x28] sm:$0xf]
  %v62 = vld [vmem:[%s0 + $0x2c] sm:$0xf]
  %v63 = vld [vmem:[%s0 + $0x30] sm:$0xf]
  %v64 = vld [vmem:[%s0 + $0x34] sm:$0xf]
  %v65 = vld [vmem:[%s0 + $0x38] sm:$0xf]
  %v66 = vld [vmem:[%s0 + $0x3c] sm:$0xf]
  %v67 = vld [vmem:[%s1] sm:$0xf]
  %v68 = vld [vmem:[%s1 + $0x4] sm:$0xf]
  %v69 = vld [vmem:[%s1 + $0x8] sm:$0xf]
  %v70 = vld [vmem:[%s1 + $0xc] sm:$0xf]
  %v71 = vld [vmem:[%s1 + $0x10] sm:$0xf]
  %v72 = vld [vmem:[%s1 + $0x14] sm:$0xf]
  %v73 = vld [vmem:[%s1 + $0x18] sm:$0xf]
  %v74 = vld [vmem:[%s1 + $0x1c] sm:$0xf]
  %v75 = vld [vmem:[%s1 + $0x20] sm:$0xf]
  %v76 = vld [vmem:[%s1 + $0x24] sm:$0xf]
  %v77 = vld [vmem:[%s1 + $0x28] sm:$0xf]
  %v78 = vld [vmem:[%s1 + $0x2c] sm:$0xf]
  %v79 = vld [vmem:[%s1 + $0x30] sm:$0xf]
  %v80 = vld [vmem:[%s1 + $0x34] sm:$0xf]
  %v81 = vld [vmem:[%s1 + $0x38] sm:$0xf]
  %v82 = vld [vmem:[%s1 + $0x3c] sm:$0xf]
  %v99 = vunpack.c.l.b16 %v51
  %v100 = vunpack.c.l.b16 %v52
  %v101 = vunpack.c.l.b16 %v53
  %v102 = vunpack.c.l.b16 %v54
  %v103 = vunpack.c.l.b16 %v55
  %v104 = vunpack.c.l.b16 %v56
  %v105 = vunpack.c.l.b16 %v57
  %v106 = vunpack.c.l.b16 %v58
  %v107 = vunpack.c.l.b16 %v59
  %v108 = vunpack.c.l.b16 %v60
  %v109 = vunpack.c.l.b16 %v61
  %v110 = vunpack.c.l.b16 %v62
  %v111 = vunpack.c.l.b16 %v63
  %v112 = vunpack.c.l.b16 %v64
  %v113 = vunpack.c.l.b16 %v65
  %v114 = vunpack.c.l.b16 %v66
  %v115 = vpack.c.b16 %v100, %v99
  %v116 = vpack.c.b16 %v102, %v101
  %v117 = vpack.c.b16 %v104, %v103
  %v118 = vpack.c.b16 %v106, %v105
  %v119 = vpack.c.b16 %v108, %v107
  %v120 = vpack.c.b16 %v110, %v109
  %v121 = vpack.c.b16 %v112, %v111
  %v122 = vpack.c.b16 %v114, %v113
  %v147 = vunpack.c.l.b16 %v67
  %v148 = vunpack.c.l.b16 %v68
  %v149 = vunpack.c.l.b16 %v69
  %v150 = vunpack.c.l.b16 %v70
  %v151 = vunpack.c.l.b16 %v71
  %v152 = vunpack.c.l.b16 %v72
  %v153 = vunpack.c.l.b16 %v73
  %v154 = vunpack.c.l.b16 %v74
  %v155 = vunpack.c.l.b16 %v75
  %v156 = vunpack.c.l.b16 %v76
  %v157 = vunpack.c.l.b16 %v77
  %v158 = vunpack.c.l.b16 %v78
  %v159 = vunpack.c.l.b16 %v79
  %v160 = vunpack.c.l.b16 %v80
  %v161 = vunpack.c.l.b16 %v81
  %v162 = vunpack.c.l.b16 %v82
  %v163 = vpack.c.b16 %v148, %v147
  %v164 = vpack.c.b16 %v150, %v149
  %v165 = vpack.c.b16 %v152, %v151
  %v166 = vpack.c.b16 %v154, %v153
  %v167 = vpack.c.b16 %v156, %v155
  %v168 = vpack.c.b16 %v158, %v157
  %v169 = vpack.c.b16 %v160, %v159
  %v170 = vpack.c.b16 %v162, %v161
  %179 = vmatprep.subr.bf16.mxu0 0
  %180 = vmatpush1.bf16.msra.mxu0 %v163
  %181 = vmatprep.subr.bf16.mxu0 0
  %182 = vmatpush1.bf16.msra.mxu0 %v164
  %183 = vmatprep.subr.bf16.mxu0 0
  %184 = vmatpush1.bf16.msra.mxu0 %v165
  %185 = vmatprep.subr.bf16.mxu0 0
  %186 = vmatpush1.bf16.msra.mxu0 %v166
  %187 = vmatprep.subr.bf16.mxu0 0
  %188 = vmatpush1.bf16.msra.mxu0 %v167
  %189 = vmatprep.subr.bf16.mxu0 0
  %190 = vmatpush1.bf16.msra.mxu0 %v168
  %191 = vmatprep.subr.bf16.mxu0 0
  %192 = vmatpush1.bf16.msra.mxu0 %v169
  %193 = vmatprep.subr.bf16.mxu0 0
  %194 = vmatpush1.bf16.msra.mxu0 %v170
  %195 = vmatprep.subr.bf16.mxu0 0
  %196 = vmatpush1.bf16.msra.mxu0 0
  %197 = vmatprep.subr.bf16.mxu0 0
  %198 = vmatpush1.bf16.msra.mxu0 0
  %199 = vmatprep.subr.bf16.mxu0 0
  %200 = vmatpush1.bf16.msra.mxu0 0
  %201 = vmatprep.subr.bf16.mxu0 0
  %202 = vmatpush1.bf16.msra.mxu0 0
  %203 = vmatprep.subr.bf16.mxu0 0
  %204 = vmatpush1.bf16.msra.mxu0 0
  %205 = vmatprep.subr.bf16.mxu0 0
  %206 = vmatpush1.bf16.msra.mxu0 0
  %207 = vmatprep.subr.bf16.mxu0 0
  %208 = vmatpush1.bf16.msra.mxu0 0
  %209 = vmatprep.subr.bf16.mxu0 0
  %210 = vmatpush1.bf16.msra.mxu0 0
  %211 = vmatprep.mubr.bf16.mxu0 0
  %212 = vmatmul.mubr.bf16.gmra.mrb[0].mxu0 %v115
  %v213 = vpop.f32.mrb[0].mxu0
  %v214 = vadd.f32 0.0, %v213
  %v215 = vpop.f32.mrb[0].mxu0
  %v216 = vpop.f32.mrb[0].mxu0
  %v217 = vadd.f32 0.0, %v216
  %v218 = vpop.f32.mrb[0].mxu0
  %219 = vmatprep.mubr.bf16.mxu0 0
  %220 = vmatmul.mubr.bf16.gmra.mrb[0].mxu0 %v116
  %v221 = vpop.f32.mrb[0].mxu0
  %v222 = vadd.f32 0.0, %v221
  %v223 = vpop.f32.mrb[0].mxu0
  %v224 = vpop.f32.mrb[0].mxu0
  %v225 = vadd.f32 0.0, %v224
  %v226 = vpop.f32.mrb[0].mxu0
  %227 = vmatprep.mubr.bf16.mxu0 0
  %228 = vmatmul.mubr.bf16.gmra.mrb[0].mxu0 %v117
  %v229 = vpop.f32.mrb[0].mxu0
  %v230 = vadd.f32 0.0, %v229
  %v231 = vpop.f32.mrb[0].mxu0
  %v232 = vpop.f32.mrb[0].mxu0
  %v233 = vadd.f32 0.0, %v232
  %v234 = vpop.f32.mrb[0].mxu0
  %235 = vmatprep.mubr.bf16.mxu0 0
  %236 = vmatmul.mubr.bf16.gmra.mrb[0].mxu0 %v118
  %v237 = vpop.f32.mrb[0].mxu0
  %v238 = vadd.f32 0.0, %v237
  %v239 = vpop.f32.mrb[0].mxu0
  %v240 = vpop.f32.mrb[0].mxu0
  %v241 = vadd.f32 0.0, %v240
  %v242 = vpop.f32.mrb[0].mxu0
  %243 = vmatprep.mubr.bf16.mxu0 0
  %244 = vmatmul.mubr.bf16.gmra.mrb[0].mxu0 %v119
  %v245 = vpop.f32.mrb[0].mxu0
  %v246 = vadd.f32 0.0, %v245
  %v247 = vpop.f32.mrb[0].mxu0
  %v248 = vpop.f32.mrb[0].mxu0
  %v249 = vadd.f32 0.0, %v248
  %v250 = vpop.f32.mrb[0].mxu0
  %251 = vmatprep.mubr.bf16.mxu0 0
  %252 = vmatmul.mubr.bf16.gmra.mrb[0].mxu0 %v120
  %v253 = vpop.f32.mrb[0].mxu0
  %v254 = vadd.f32 0.0, %v253
  %v255 = vpop.f32.mrb[0].mxu0
  %v256 = vpop.f32.mrb[0].mxu0
  %v257 = vadd.f32 0.0, %v256
  %v258 = vpop.f32.mrb[0].mxu0
  %259 = vmatprep.mubr.bf16.mxu0 0
  %260 = vmatmul.mubr.bf16.gmra.mrb[0].mxu0 %v121
  %v261 = vpop.f32.mrb[0].mxu0
  %v262 = vadd.f32 0.0, %v261
  %v263 = vpop.f32.mrb[0].mxu0
  %v264 = vpop.f32.mrb[0].mxu0
  %v265 = vadd.f32 0.0, %v264
  %v266 = vpop.f32.mrb[0].mxu0
  %267 = vmatprep.mubr.bf16.mxu0 0
  %268 = vmatmul.mubr.bf16.gmra.mrb[0].mxu0 %v122
  %v269 = vpop.f32.mrb[0].mxu0
  %v270 = vadd.f32 0.0, %v269
  %v271 = vpop.f32.mrb[0].mxu0
  %v272 = vpop.f32.mrb[0].mxu0
  %v273 = vadd.f32 0.0, %v272
  %v274 = vpop.f32.mrb[0].mxu0
  %275 = vdwg.mxu0
  %v276 = vadd.f32 %v35, %v214
  %v277 = vadd.f32 %v36, %v217
  %v278 = vadd.f32 %v37, %v222
  %v279 = vadd.f32 %v38, %v225
  %v280 = vadd.f32 %v39, %v230
  %v281 = vadd.f32 %v40, %v233
  %v282 = vadd.f32 %v41, %v238
  %v283 = vadd.f32 %v42, %v241
  %v284 = vadd.f32 %v43, %v246
  %v285 = vadd.f32 %v44, %v249
  %v286 = vadd.f32 %v45, %v254
  %v287 = vadd.f32 %v46, %v257
  %v288 = vadd.f32 %v47, %v262
  %v289 = vadd.f32 %v48, %v265
  %v290 = vadd.f32 %v49, %v270
  %v291 = vadd.f32 %v50, %v273
  %292 = vst [vmem:[#allocation2] sm:$0xff] %v276
  %293 = vst [vmem:[#allocation2 + $0x8] sm:$0xff] %v277
  %294 = vst [vmem:[#allocation2 + $0x10] sm:$0xff] %v278
  %295 = vst [vmem:[#allocation2 + $0x18] sm:$0xff] %v279
  %296 = vst [vmem:[#allocation2 + $0x20] sm:$0xff] %v280
  %297 = vst [vmem:[#allocation2 + $0x28] sm:$0xff] %v281
  %298 = vst [vmem:[#allocation2 + $0x30] sm:$0xff] %v282
  %299 = vst [vmem:[#allocation2 + $0x38] sm:$0xff] %v283
  %300 = vst [vmem:[#allocation2 + $0x40] sm:$0xff] %v284
  %301 = vst [vmem:[#allocation2 + $0x48] sm:$0xff] %v285
  %302 = vst [vmem:[#allocation2 + $0x50] sm:$0xff] %v286
  %303 = vst [vmem:[#allocation2 + $0x58] sm:$0xff] %v287
  %304 = vst [vmem:[#allocation2 + $0x60] sm:$0xff] %v288
  %305 = vst [vmem:[#allocation2 + $0x68] sm:$0xff] %v289
  %306 = vst [vmem:[#allocation2 + $0x70] sm:$0xff] %v290
  %307 = vst [vmem:[#allocation2 + $0x78] sm:$0xff] %v291
  // Predicated region
  $region18: #{gnn_forward.3} parent=0 // pred_check
    %p308 = pneg %p15
  $region19: #{gnn_forward.3} parent=0 // pred_check_branch
    %310 = sbr.rel (%p308) target = $region21
  $region20: #{gnn_forward.3} parent=0 // pred_region
    %v311 = vld [vmem:[#allocation2] sm:$0xff]
    %v312 = vld [vmem:[#allocation2 + $0x8] sm:$0xff]
    %v313 = vld [vmem:[#allocation2 + $0x10] sm:$0xff]
    %v314 = vld [vmem:[#allocation2 + $0x18] sm:$0xff]
    %v315 = vld [vmem:[#allocation2 + $0x20] sm:$0xff]
    %v316 = vld [vmem:[#allocation2 + $0x28] sm:$0xff]
    %v317 = vld [vmem:[#allocation2 + $0x30] sm:$0xff]
    %v318 = vld [vmem:[#allocation2 + $0x38] sm:$0xff]
    %v319 = vld [vmem:[#allocation2 + $0x40] sm:$0xff]
    %v320 = vld [vmem:[#allocation2 + $0x48] sm:$0xff]
    %v321 = vld [vmem:[#allocation2 + $0x50] sm:$0xff]
    %v322 = vld [vmem:[#allocation2 + $0x58] sm:$0xff]
    %v323 = vld [vmem:[#allocation2 + $0x60] sm:$0xff]
    %v324 = vld [vmem:[#allocation2 + $0x68] sm:$0xff]
    %v325 = vld [vmem:[#allocation2 + $0x70] sm:$0xff]
    %v326 = vld [vmem:[#allocation2 + $0x78] sm:$0xff]
    %v327 = vld [vmem:[%s2] sm:$0x1]
    %v329 = vlaneseq
    %v330 = vshrl.u32 %v329, 7
    %v331 = vsub.s32 0, %v330
    %v332 = vrot.slane %v327, %v331
    %v334 = vadd.f32 %v311, %v332
    %v335 = vadd.f32 %v312, %v332
    %v336 = vadd.f32 %v313, %v332
    %v337 = vadd.f32 %v314, %v332
    %v338 = vadd.f32 %v315, %v332
    %v339 = vadd.f32 %v316, %v332
    %v340 = vadd.f32 %v317, %v332
    %v341 = vadd.f32 %v318, %v332
    %v342 = vadd.f32 %v319, %v332
    %v343 = vadd.f32 %v320, %v332
    %v344 = vadd.f32 %v321, %v332
    %v345 = vadd.f32 %v322, %v332
    %v346 = vadd.f32 %v323, %v332
    %v347 = vadd.f32 %v324, %v332
    %v348 = vadd.f32 %v325, %v332
    %v349 = vadd.f32 %v326, %v332
    %v350 = vlaneseq
    %v351 = vand.u32 %v350, 127
    %vm352 = vcmp.lt.s32.totalorder %v351, 2
    %v353 = vsel %vm352, %v334, -inf
    %v354 = vsel %vm352, %v335, -inf
    %v355 = vsel %vm352, %v336, -inf
    %v356 = vsel %vm352, %v337, -inf
    %v357 = vsel %vm352, %v338, -inf
    %v358 = vsel %vm352, %v339, -inf
    %v359 = vsel %vm352, %v340, -inf
    %v360 = vsel %vm352, %v341, -inf
    %v361 = vsel %vm352, %v342, -inf
    %v362 = vsel %vm352, %v343, -inf
    %v363 = vsel %vm352, %v344, -inf
    %v364 = vsel %vm352, %v345, -inf
    %v365 = vsel %vm352, %v346, -inf
    %v366 = vsel %vm352, %v347, -inf
    %v367 = vsel %vm352, %v348, -inf
    %v368 = vsel %vm352, %v349, -inf
    %369 = vmax.xlane.f32.xlu0 %v353
    %v370 = vpop.xlane.xlu0 %369
    %371 = vmax.xlane.f32.xlu0 %v354
    %v372 = vpop.xlane.xlu0 %371
    %373 = vmax.xlane.f32.xlu0 %v355
    %v374 = vpop.xlane.xlu0 %373
    %375 = vmax.xlane.f32.xlu0 %v356
    %v376 = vpop.xlane.xlu0 %375
    %377 = vmax.xlane.f32.xlu0 %v357
    %v378 = vpop.xlane.xlu0 %377
    %379 = vmax.xlane.f32.xlu0 %v358
    %v380 = vpop.xlane.xlu0 %379
    %381 = vmax.xlane.f32.xlu0 %v359
    %v382 = vpop.xlane.xlu0 %381
    %383 = vmax.xlane.f32.xlu0 %v360
    %v384 = vpop.xlane.xlu0 %383
    %385 = vmax.xlane.f32.xlu0 %v361
    %v386 = vpop.xlane.xlu0 %385
    %387 = vmax.xlane.f32.xlu0 %v362
    %v388 = vpop.xlane.xlu0 %387
    %389 = vmax.xlane.f32.xlu0 %v363
    %v390 = vpop.xlane.xlu0 %389
    %391 = vmax.xlane.f32.xlu0 %v364
    %v392 = vpop.xlane.xlu0 %391
    %393 = vmax.xlane.f32.xlu0 %v365
    %v394 = vpop.xlane.xlu0 %393
    %395 = vmax.xlane.f32.xlu0 %v366
    %v396 = vpop.xlane.xlu0 %395
    %397 = vmax.xlane.f32.xlu0 %v367
    %v398 = vpop.xlane.xlu0 %397
    %399 = vmax.xlane.f32.xlu0 %v368
    %v400 = vpop.xlane.xlu0 %399
    %v401 = vsub.f32 %v353, %v370
    %v402 = vsub.f32 %v354, %v372
    %v403 = vsub.f32 %v355, %v374
    %v404 = vsub.f32 %v356, %v376
    %v405 = vsub.f32 %v357, %v378
    %v406 = vsub.f32 %v358, %v380
    %v407 = vsub.f32 %v359, %v382
    %v408 = vsub.f32 %v360, %v384
    %v409 = vsub.f32 %v361, %v386
    %v410 = vsub.f32 %v362, %v388
    %v411 = vsub.f32 %v363, %v390
    %v412 = vsub.f32 %v364, %v392
    %v413 = vsub.f32 %v365, %v394
    %v414 = vsub.f32 %v366, %v396
    %v415 = vsub.f32 %v367, %v398
    %v416 = vsub.f32 %v368, %v400
    %v417 = vmul.f32 %v401, 1.442695
    %v418 = vpow.pop %v417
    %v419 = vmul.f32 %v402, 1.442695
    %v420 = vpow.pop %v419
    %v421 = vmul.f32 %v403, 1.442695
    %v422 = vpow.pop %v421
    %v423 = vmul.f32 %v404, 1.442695
    %v424 = vpow.pop %v423
    %v425 = vmul.f32 %v405, 1.442695
    %v426 = vpow.pop %v425
    %v427 = vmul.f32 %v406, 1.442695
    %v428 = vpow.pop %v427
    %v429 = vmul.f32 %v407, 1.442695
    %v430 = vpow.pop %v429
    %v431 = vmul.f32 %v408, 1.442695
    %v432 = vpow.pop %v431
    %v433 = vmul.f32 %v409, 1.442695
    %v434 = vpow.pop %v433
    %v435 = vmul.f32 %v410, 1.442695
    %v436 = vpow.pop %v435
    %v437 = vmul.f32 %v411, 1.442695
    %v438 = vpow.pop %v437
    %v439 = vmul.f32 %v412, 1.442695
    %v440 = vpow.pop %v439
    %v441 = vmul.f32 %v413, 1.442695
    %v442 = vpow.pop %v441
    %v443 = vmul.f32 %v414, 1.442695
    %v444 = vpow.pop %v443
    %v445 = vmul.f32 %v415, 1.442695
    %v446 = vpow.pop %v445
    %v447 = vmul.f32 %v416, 1.442695
    %v448 = vpow.pop %v447
    %449 = vadd.xlane.f32.xlu0 %v418
    %v450 = vpop.xlane.xlu0 %449
    %451 = vadd.xlane.f32.xlu0 %v420
    %v452 = vpop.xlane.xlu0 %451
    %453 = vadd.xlane.f32.xlu0 %v422
    %v454 = vpop.xlane.xlu0 %453
    %455 = vadd.xlane.f32.xlu0 %v424
    %v456 = vpop.xlane.xlu0 %455
    %457 = vadd.xlane.f32.xlu0 %v426
    %v458 = vpop.xlane.xlu0 %457
    %459 = vadd.xlane.f32.xlu0 %v428
    %v460 = vpop.xlane.xlu0 %459
    %461 = vadd.xlane.f32.xlu0 %v430
    %v462 = vpop.xlane.xlu0 %461
    %463 = vadd.xlane.f32.xlu0 %v432
    %v464 = vpop.xlane.xlu0 %463
    %465 = vadd.xlane.f32.xlu0 %v434
    %v466 = vpop.xlane.xlu0 %465
    %467 = vadd.xlane.f32.xlu0 %v436
    %v468 = vpop.xlane.xlu0 %467
    %469 = vadd.xlane.f32.xlu0 %v438
    %v470 = vpop.xlane.xlu0 %469
    %471 = vadd.xlane.f32.xlu0 %v440
    %v472 = vpop.xlane.xlu0 %471
    %473 = vadd.xlane.f32.xlu0 %v442
    %v474 = vpop.xlane.xlu0 %473
    %475 = vadd.xlane.f32.xlu0 %v444
    %v476 = vpop.xlane.xlu0 %475
    %477 = vadd.xlane.f32.xlu0 %v446
    %v478 = vpop.xlane.xlu0 %477
    %479 = vadd.xlane.f32.xlu0 %v448
    %v480 = vpop.xlane.xlu0 %479
    %v481 = vlog2.pop %v450
    %v482 = vmul.f32 %v481, 0.6931472
    %v483 = vlog2.pop %v452
    %v484 = vmul.f32 %v483, 0.6931472
    %v485 = vlog2.pop %v454
    %v486 = vmul.f32 %v485, 0.6931472
    %v487 = vlog2.pop %v456
    %v488 = vmul.f32 %v487, 0.6931472
    %v489 = vlog2.pop %v458
    %v490 = vmul.f32 %v489, 0.6931472
    %v491 = vlog2.pop %v460
    %v492 = vmul.f32 %v491, 0.6931472
    %v493 = vlog2.pop %v462
    %v494 = vmul.f32 %v493, 0.6931472
    %v495 = vlog2.pop %v464
    %v496 = vmul.f32 %v495, 0.6931472
    %v497 = vlog2.pop %v466
    %v498 = vmul.f32 %v497, 0.6931472
    %v499 = vlog2.pop %v468
    %v500 = vmul.f32 %v499, 0.6931472
    %v501 = vlog2.pop %v470
    %v502 = vmul.f32 %v501, 0.6931472
    %v503 = vlog2.pop %v472
    %v504 = vmul.f32 %v503, 0.6931472
    %v505 = vlog2.pop %v474
    %v506 = vmul.f32 %v505, 0.6931472
    %v507 = vlog2.pop %v476
    %v508 = vmul.f32 %v507, 0.6931472
    %v509 = vlog2.pop %v478
    %v510 = vmul.f32 %v509, 0.6931472
    %v511 = vlog2.pop %v480
    %v512 = vmul.f32 %v511, 0.6931472
    %v513 = vadd.f32 %v482, %v370
    %v514 = vadd.f32 %v484, %v372
    %v515 = vadd.f32 %v486, %v374
    %v516 = vadd.f32 %v488, %v376
    %v517 = vadd.f32 %v490, %v378
    %v518 = vadd.f32 %v492, %v380
    %v519 = vadd.f32 %v494, %v382
    %v520 = vadd.f32 %v496, %v384
    %v521 = vadd.f32 %v498, %v386
    %v522 = vadd.f32 %v500, %v388
    %v523 = vadd.f32 %v502, %v390
    %v524 = vadd.f32 %v504, %v392
    %v525 = vadd.f32 %v506, %v394
    %v526 = vadd.f32 %v508, %v396
    %v527 = vadd.f32 %v510, %v398
    %v528 = vadd.f32 %v512, %v400
    %v529 = vsub.f32 %v334, %v513
    %v530 = vsub.f32 %v335, %v514
    %v531 = vsub.f32 %v336, %v515
    %v532 = vsub.f32 %v337, %v516
    %v533 = vsub.f32 %v338, %v517
    %v534 = vsub.f32 %v339, %v518
    %v535 = vsub.f32 %v340, %v519
    %v536 = vsub.f32 %v341, %v520
    %v537 = vsub.f32 %v342, %v521
    %v538 = vsub.f32 %v343, %v522
    %v539 = vsub.f32 %v344, %v523
    %v540 = vsub.f32 %v345, %v524
    %v541 = vsub.f32 %v346, %v525
    %v542 = vsub.f32 %v347, %v526
    %v543 = vsub.f32 %v348, %v527
    %v544 = vsub.f32 %v349, %v528
    %545 = vst [vmem:[%s3] sm:$0xff] %v529
    %546 = vst [vmem:[%s3 + $0x8] sm:$0xff] %v530
    %547 = vst [vmem:[%s3 + $0x10] sm:$0xff] %v531
    %548 = vst [vmem:[%s3 + $0x18] sm:$0xff] %v532
    %549 = vst [vmem:[%s3 + $0x20] sm:$0xff] %v533
    %550 = vst [vmem:[%s3 + $0x28] sm:$0xff] %v534
    %551 = vst [vmem:[%s3 + $0x30] sm:$0xff] %v535
    %552 = vst [vmem:[%s3 + $0x38] sm:$0xff] %v536
    %553 = vst [vmem:[%s3 + $0x40] sm:$0xff] %v537
    %554 = vst [vmem:[%s3 + $0x48] sm:$0xff] %v538
    %555 = vst [vmem:[%s3 + $0x50] sm:$0xff] %v539
    %556 = vst [vmem:[%s3 + $0x58] sm:$0xff] %v540
    %557 = vst [vmem:[%s3 + $0x60] sm:$0xff] %v541
    %558 = vst [vmem:[%s3 + $0x68] sm:$0xff] %v542
    %559 = vst [vmem:[%s3 + $0x70] sm:$0xff] %v543
    %560 = vst [vmem:[%s3 + $0x78] sm:$0xff] %v544
  $region21: #{gnn_forward.3} parent=0 // pred_fallthru
    _
  // Predicated region
  $region22: #{gnn_forward.3} parent=0 // pred_check
    _
  $region23: #{gnn_forward.3} parent=0 // pred_check_branch
    %562 = sbr.rel (0) target = $region25
  $region24: #{gnn_forward.3} parent=0 // pred_region
    _
  $region25: #{gnn_forward.3} parent=0 // pred_fallthru
    _
  // Predicated region
  $region26: #{gnn_forward.3} parent=0 // pred_check
    _
  $region27: #{gnn_forward.3} parent=0 // pred_check_branch
    %564 = sbr.rel (0) target = $region29
  $region28: #{gnn_forward.3} parent=0 // pred_region
    _
  $region29: #{gnn_forward.3} parent=0 // pred_fallthru
    _

// kernel: gnn_forward.2
$region0: #{gnn_forward.2}
  #allocation0 [shape = 'u32[]', space=smem, size = 0x4, offset = 0x4, fixed_abs, tag = 'smem constant byte address 0x4 - core index']
  #allocation1 [shape = 'u32[144,128]{1,0:T(1,128)}', space=vmem, size = 0x12000, scoped, tag = 'internal scratch']
  #allocation2 [shape = 'f32[128,128]{1,0:T(8,128)}', space=vmem, size = 0x10000, scoped, tag = 'scratch operand']
  %s0 = inlined_call_operand.vmem [shape: bf16[128,128], index: 0, kind: input, shape index: {}]
  %s1 = inlined_call_operand.vmem [shape: bf16[128,128], index: 1, kind: input, shape index: {}]
  %s2 = inlined_call_operand.vmem [shape: f32[1,128], index: 2, kind: input, shape index: {}]
  %s3 = inlined_call_operand.vmem [shape: bf16[128,128], index: 3, kind: input, shape index: {}]
  %s4 = inlined_call_operand.vmem [shape: bf16[128,128], index: 4, kind: output, shape index: {}]
  %s5 = sld [smem:[#allocation0]]
  $region34: #{gnn_forward.2} parent=0
    _
  %s7 = ssub.s32 1, %s5
  %s8 = scalar_select 0, %s7, %s5
  // Predicated region
  $region2: #{gnn_forward.2} parent=0 // pred_check
    _
  $region3: #{gnn_forward.2} parent=0 // pred_check_branch
    %10 = sbr.rel (0) target = $region5
  $region4: #{gnn_forward.2} parent=0 // pred_region
    _
  $region5: #{gnn_forward.2} parent=0 // pred_fallthru
    _
  // Predicated region
  $region6: #{gnn_forward.2} parent=0 // pred_check
    _
  $region7: #{gnn_forward.2} parent=0 // pred_check_branch
    %12 = sbr.rel (0) target = $region9
  $region8: #{gnn_forward.2} parent=0 // pred_region
    _
  $region9: #{gnn_forward.2} parent=0 // pred_fallthru
    _
  // Predicated region
  $region10: #{gnn_forward.2} parent=0 // pred_check
    _
  $region11: #{gnn_forward.2} parent=0 // pred_check_branch
    %14 = sbr.rel (0) target = $region13
  $region12: #{gnn_forward.2} parent=0 // pred_region
    _
  $region13: #{gnn_forward.2} parent=0 // pred_fallthru
    _
  // Predicated region
  $region14: #{gnn_forward.2} parent=0 // pred_check
    _
  $region15: #{gnn_forward.2} parent=0 // pred_check_branch
    %16 = sbr.rel (0) target = $region17
  $region16: #{gnn_forward.2} parent=0 // pred_region
    _
  $region17: #{gnn_forward.2} parent=0 // pred_fallthru
    _
  %p18 = scmp.eq.s32.totalorder 0, 0
  // Predicated region
  $region18: #{gnn_forward.2} parent=0 // pred_check
    %p19 = pneg %p18
  $region19: #{gnn_forward.2} parent=0 // pred_check_branch
    %21 = sbr.rel (%p19) target = $region21
  $region20: #{gnn_forward.2} parent=0 // pred_region
    %22 = vst [vmem:[#allocation2] sm:$0xff] 0.0
    %23 = vst [vmem:[#allocation2 + $0x8] sm:$0xff] 0.0
    %24 = vst [vmem:[#allocation2 + $0x10] sm:$0xff] 0.0
    %25 = vst [vmem:[#allocation2 + $0x18] sm:$0xff] 0.0
    %26 = vst [vmem:[#allocation2 + $0x20] sm:$0xff] 0.0
    %27 = vst [vmem:[#allocation2 + $0x28] sm:$0xff] 0.0
    %28 = vst [vmem:[#allocation2 + $0x30] sm:$0xff] 0.0
    %29 = vst [vmem:[#allocation2 + $0x38] sm:$0xff] 0.0
    %30 = vst [vmem:[#allocation2 + $0x40] sm:$0xff] 0.0
    %31 = vst [vmem:[#allocation2 + $0x48] sm:$0xff] 0.0
    %32 = vst [vmem:[#allocation2 + $0x50] sm:$0xff] 0.0
    %33 = vst [vmem:[#allocation2 + $0x58] sm:$0xff] 0.0
    %34 = vst [vmem:[#allocation2 + $0x60] sm:$0xff] 0.0
    %35 = vst [vmem:[#allocation2 + $0x68] sm:$0xff] 0.0
    %36 = vst [vmem:[#allocation2 + $0x70] sm:$0xff] 0.0
    %37 = vst [vmem:[#allocation2 + $0x78] sm:$0xff] 0.0
  $region21: #{gnn_forward.2} parent=0 // pred_fallthru
    _
  %v38 = vld [vmem:[#allocation2] sm:$0xff]
  %v39 = vld [vmem:[#allocation2 + $0x8] sm:$0xff]
  %v40 = vld [vmem:[#allocation2 + $0x10] sm:$0xff]
  %v41 = vld [vmem:[#allocation2 + $0x18] sm:$0xff]
  %v42 = vld [vmem:[#allocation2 + $0x20] sm:$0xff]
  %v43 = vld [vmem:[#allocation2 + $0x28] sm:$0xff]
  %v44 = vld [vmem:[#allocation2 + $0x30] sm:$0xff]
  %v45 = vld [vmem:[#allocation2 + $0x38] sm:$0xff]
  %v46 = vld [vmem:[#allocation2 + $0x40] sm:$0xff]
  %v47 = vld [vmem:[#allocation2 + $0x48] sm:$0xff]
  %v48 = vld [vmem:[#allocation2 + $0x50] sm:$0xff]
  %v49 = vld [vmem:[#allocation2 + $0x58] sm:$0xff]
  %v50 = vld [vmem:[#allocation2 + $0x60] sm:$0xff]
  %v51 = vld [vmem:[#allocation2 + $0x68] sm:$0xff]
  %v52 = vld [vmem:[#allocation2 + $0x70] sm:$0xff]
  %v53 = vld [vmem:[#allocation2 + $0x78] sm:$0xff]
  %v54 = vld [vmem:[%s0] sm:$0xf]
  %v55 = vld [vmem:[%s0 + $0x4] sm:$0xf]
  %v56 = vld [vmem:[%s0 + $0x8] sm:$0xf]
  %v57 = vld [vmem:[%s0 + $0xc] sm:$0xf]
  %v58 = vld [vmem:[%s0 + $0x10] sm:$0xf]
  %v59 = vld [vmem:[%s0 + $0x14] sm:$0xf]
  %v60 = vld [vmem:[%s0 + $0x18] sm:$0xf]
  %v61 = vld [vmem:[%s0 + $0x1c] sm:$0xf]
  %v62 = vld [vmem:[%s0 + $0x20] sm:$0xf]
  %v63 = vld [vmem:[%s0 + $0x24] sm:$0xf]
  %v64 = vld [vmem:[%s0 + $0x28] sm:$0xf]
  %v65 = vld [vmem:[%s0 + $0x2c] sm:$0xf]
  %v66 = vld [vmem:[%s0 + $0x30] sm:$0xf]
  %v67 = vld [vmem:[%s0 + $0x34] sm:$0xf]
  %v68 = vld [vmem:[%s0 + $0x38] sm:$0xf]
  %v69 = vld [vmem:[%s0 + $0x3c] sm:$0xf]
  %v70 = vld [vmem:[%s1] sm:$0xf]
  %v71 = vld [vmem:[%s1 + $0x4] sm:$0xf]
  %v72 = vld [vmem:[%s1 + $0x8] sm:$0xf]
  %v73 = vld [vmem:[%s1 + $0xc] sm:$0xf]
  %v74 = vld [vmem:[%s1 + $0x10] sm:$0xf]
  %v75 = vld [vmem:[%s1 + $0x14] sm:$0xf]
  %v76 = vld [vmem:[%s1 + $0x18] sm:$0xf]
  %v77 = vld [vmem:[%s1 + $0x1c] sm:$0xf]
  %v78 = vld [vmem:[%s1 + $0x20] sm:$0xf]
  %v79 = vld [vmem:[%s1 + $0x24] sm:$0xf]
  %v80 = vld [vmem:[%s1 + $0x28] sm:$0xf]
  %v81 = vld [vmem:[%s1 + $0x2c] sm:$0xf]
  %v82 = vld [vmem:[%s1 + $0x30] sm:$0xf]
  %v83 = vld [vmem:[%s1 + $0x34] sm:$0xf]
  %v84 = vld [vmem:[%s1 + $0x38] sm:$0xf]
  %v85 = vld [vmem:[%s1 + $0x3c] sm:$0xf]
  %v102 = vunpack.c.l.b16 %v54
  %v103 = vunpack.c.l.b16 %v55
  %v104 = vunpack.c.l.b16 %v56
  %v105 = vunpack.c.l.b16 %v57
  %v106 = vunpack.c.l.b16 %v58
  %v107 = vunpack.c.l.b16 %v59
  %v108 = vunpack.c.l.b16 %v60
  %v109 = vunpack.c.l.b16 %v61
  %v110 = vunpack.c.l.b16 %v62
  %v111 = vunpack.c.l.b16 %v63
  %v112 = vunpack.c.l.b16 %v64
  %v113 = vunpack.c.l.b16 %v65
  %v114 = vunpack.c.l.b16 %v66
  %v115 = vunpack.c.l.b16 %v67
  %v116 = vunpack.c.l.b16 %v68
  %v117 = vunpack.c.l.b16 %v69
  %v118 = vpack.c.b16 %v103, %v102
  %v119 = vpack.c.b16 %v105, %v104
  %v120 = vpack.c.b16 %v107, %v106
  %v121 = vpack.c.b16 %v109, %v108
  %v122 = vpack.c.b16 %v111, %v110
  %v123 = vpack.c.b16 %v113, %v112
  %v124 = vpack.c.b16 %v115, %v114
  %v125 = vpack.c.b16 %v117, %v116
  %v150 = vunpack.c.l.b16 %v70
  %v151 = vunpack.c.l.b16 %v71
  %v152 = vunpack.c.l.b16 %v72
  %v153 = vunpack.c.l.b16 %v73
  %v154 = vunpack.c.l.b16 %v74
  %v155 = vunpack.c.l.b16 %v75
  %v156 = vunpack.c.l.b16 %v76
  %v157 = vunpack.c.l.b16 %v77
  %v158 = vunpack.c.l.b16 %v78
  %v159 = vunpack.c.l.b16 %v79
  %v160 = vunpack.c.l.b16 %v80
  %v161 = vunpack.c.l.b16 %v81
  %v162 = vunpack.c.l.b16 %v82
  %v163 = vunpack.c.l.b16 %v83
  %v164 = vunpack.c.l.b16 %v84
  %v165 = vunpack.c.l.b16 %v85
  %v166 = vpack.c.b16 %v151, %v150
  %v167 = vpack.c.b16 %v153, %v152
  %v168 = vpack.c.b16 %v155, %v154
  %v169 = vpack.c.b16 %v157, %v156
  %v170 = vpack.c.b16 %v159, %v158
  %v171 = vpack.c.b16 %v161, %v160
  %v172 = vpack.c.b16 %v163, %v162
  %v173 = vpack.c.b16 %v165, %v164
  %182 = vmatprep.subr.bf16.mxu0 0
  %183 = vmatpush1.bf16.msra.mxu0 %v166
  %184 = vmatprep.subr.bf16.mxu0 0
  %185 = vmatpush1.bf16.msra.mxu0 %v167
  %186 = vmatprep.subr.bf16.mxu0 0
  %187 = vmatpush1.bf16.msra.mxu0 %v168
  %188 = vmatprep.subr.bf16.mxu0 0
  %189 = vmatpush1.bf16.msra.mxu0 %v169
  %190 = vmatprep.subr.bf16.mxu0 0
  %191 = vmatpush1.bf16.msra.mxu0 %v170
  %192 = vmatprep.subr.bf16.mxu0 0
  %193 = vmatpush1.bf16.msra.mxu0 %v171
  %194 = vmatprep.subr.bf16.mxu0 0
  %195 = vmatpush1.bf16.msra.mxu0 %v172
  %196 = vmatprep.subr.bf16.mxu0 0
  %197 = vmatpush1.bf16.msra.mxu0 %v173
  %198 = vmatprep.subr.bf16.mxu0 0
  %199 = vmatpush1.bf16.msra.mxu0 0
  %200 = vmatprep.subr.bf16.mxu0 0
  %201 = vmatpush1.bf16.msra.mxu0 0
  %202 = vmatprep.subr.bf16.mxu0 0
  %203 = vmatpush1.bf16.msra.mxu0 0
  %204 = vmatprep.subr.bf16.mxu0 0
  %205 = vmatpush1.bf16.msra.mxu0 0
  %206 = vmatprep.subr.bf16.mxu0 0
  %207 = vmatpush1.bf16.msra.mxu0 0
  %208 = vmatprep.subr.bf16.mxu0 0
  %209 = vmatpush1.bf16.msra.mxu0 0
  %210 = vmatprep.subr.bf16.mxu0 0
  %211 = vmatpush1.bf16.msra.mxu0 0
  %212 = vmatprep.subr.bf16.mxu0 0
  %213 = vmatpush1.bf16.msra.mxu0 0
  %214 = vmatprep.mubr.bf16.mxu0 0
  %215 = vmatmul.mubr.bf16.gmra.mrb[0].mxu0 %v118
  %v216 = vpop.f32.mrb[0].mxu0
  %v217 = vadd.f32 0.0, %v216
  %v218 = vpop.f32.mrb[0].mxu0
  %v219 = vpop.f32.mrb[0].mxu0
  %v220 = vadd.f32 0.0, %v219
  %v221 = vpop.f32.mrb[0].mxu0
  %222 = vmatprep.mubr.bf16.mxu0 0
  %223 = vmatmul.mubr.bf16.gmra.mrb[0].mxu0 %v119
  %v224 = vpop.f32.mrb[0].mxu0
  %v225 = vadd.f32 0.0, %v224
  %v226 = vpop.f32.mrb[0].mxu0
  %v227 = vpop.f32.mrb[0].mxu0
  %v228 = vadd.f32 0.0, %v227
  %v229 = vpop.f32.mrb[0].mxu0
  %230 = vmatprep.mubr.bf16.mxu0 0
  %231 = vmatmul.mubr.bf16.gmra.mrb[0].mxu0 %v120
  %v232 = vpop.f32.mrb[0].mxu0
  %v233 = vadd.f32 0.0, %v232
  %v234 = vpop.f32.mrb[0].mxu0
  %v235 = vpop.f32.mrb[0].mxu0
  %v236 = vadd.f32 0.0, %v235
  %v237 = vpop.f32.mrb[0].mxu0
  %238 = vmatprep.mubr.bf16.mxu0 0
  %239 = vmatmul.mubr.bf16.gmra.mrb[0].mxu0 %v121
  %v240 = vpop.f32.mrb[0].mxu0
  %v241 = vadd.f32 0.0, %v240
  %v242 = vpop.f32.mrb[0].mxu0
  %v243 = vpop.f32.mrb[0].mxu0
  %v244 = vadd.f32 0.0, %v243
  %v245 = vpop.f32.mrb[0].mxu0
  %246 = vmatprep.mubr.bf16.mxu0 0
  %247 = vmatmul.mubr.bf16.gmra.mrb[0].mxu0 %v122
  %v248 = vpop.f32.mrb[0].mxu0
  %v249 = vadd.f32 0.0, %v248
  %v250 = vpop.f32.mrb[0].mxu0
  %v251 = vpop.f32.mrb[0].mxu0
  %v252 = vadd.f32 0.0, %v251
  %v253 = vpop.f32.mrb[0].mxu0
  %254 = vmatprep.mubr.bf16.mxu0 0
  %255 = vmatmul.mubr.bf16.gmra.mrb[0].mxu0 %v123
  %v256 = vpop.f32.mrb[0].mxu0
  %v257 = vadd.f32 0.0, %v256
  %v258 = vpop.f32.mrb[0].mxu0
  %v259 = vpop.f32.mrb[0].mxu0
  %v260 = vadd.f32 0.0, %v259
  %v261 = vpop.f32.mrb[0].mxu0
  %262 = vmatprep.mubr.bf16.mxu0 0
  %263 = vmatmul.mubr.bf16.gmra.mrb[0].mxu0 %v124
  %v264 = vpop.f32.mrb[0].mxu0
  %v265 = vadd.f32 0.0, %v264
  %v266 = vpop.f32.mrb[0].mxu0
  %v267 = vpop.f32.mrb[0].mxu0
  %v268 = vadd.f32 0.0, %v267
  %v269 = vpop.f32.mrb[0].mxu0
  %270 = vmatprep.mubr.bf16.mxu0 0
  %271 = vmatmul.mubr.bf16.gmra.mrb[0].mxu0 %v125
  %v272 = vpop.f32.mrb[0].mxu0
  %v273 = vadd.f32 0.0, %v272
  %v274 = vpop.f32.mrb[0].mxu0
  %v275 = vpop.f32.mrb[0].mxu0
  %v276 = vadd.f32 0.0, %v275
  %v277 = vpop.f32.mrb[0].mxu0
  %278 = vdwg.mxu0
  %v279 = vadd.f32 %v38, %v217
  %v280 = vadd.f32 %v39, %v220
  %v281 = vadd.f32 %v40, %v225
  %v282 = vadd.f32 %v41, %v228
  %v283 = vadd.f32 %v42, %v233
  %v284 = vadd.f32 %v43, %v236
  %v285 = vadd.f32 %v44, %v241
  %v286 = vadd.f32 %v45, %v244
  %v287 = vadd.f32 %v46, %v249
  %v288 = vadd.f32 %v47, %v252
  %v289 = vadd.f32 %v48, %v257
  %v290 = vadd.f32 %v49, %v260
  %v291 = vadd.f32 %v50, %v265
  %v292 = vadd.f32 %v51, %v268
  %v293 = vadd.f32 %v52, %v273
  %v294 = vadd.f32 %v53, %v276
  %295 = vst [vmem:[#allocation2] sm:$0xff] %v279
  %296 = vst [vmem:[#allocation2 + $0x8] sm:$0xff] %v280
  %297 = vst [vmem:[#allocation2 + $0x10] sm:$0xff] %v281
  %298 = vst [vmem:[#allocation2 + $0x18] sm:$0xff] %v282
  %299 = vst [vmem:[#allocation2 + $0x20] sm:$0xff] %v283
  %300 = vst [vmem:[#allocation2 + $0x28] sm:$0xff] %v284
  %301 = vst [vmem:[#allocation2 + $0x30] sm:$0xff] %v285
  %302 = vst [vmem:[#allocation2 + $0x38] sm:$0xff] %v286
  %303 = vst [vmem:[#allocation2 + $0x40] sm:$0xff] %v287
  %304 = vst [vmem:[#allocation2 + $0x48] sm:$0xff] %v288
  %305 = vst [vmem:[#allocation2 + $0x50] sm:$0xff] %v289
  %306 = vst [vmem:[#allocation2 + $0x58] sm:$0xff] %v290
  %307 = vst [vmem:[#allocation2 + $0x60] sm:$0xff] %v291
  %308 = vst [vmem:[#allocation2 + $0x68] sm:$0xff] %v292
  %309 = vst [vmem:[#allocation2 + $0x70] sm:$0xff] %v293
  %310 = vst [vmem:[#allocation2 + $0x78] sm:$0xff] %v294
  // Predicated region
  $region22: #{gnn_forward.2} parent=0 // pred_check
    %p311 = pneg %p18
  $region23: #{gnn_forward.2} parent=0 // pred_check_branch
    %313 = sbr.rel (%p311) target = $region25
  $region24: #{gnn_forward.2} parent=0 // pred_region
    %v314 = vld [vmem:[#allocation2] sm:$0xff]
    %v315 = vld [vmem:[#allocation2 + $0x8] sm:$0xff]
    %v316 = vld [vmem:[#allocation2 + $0x10] sm:$0xff]
    %v317 = vld [vmem:[#allocation2 + $0x18] sm:$0xff]
    %v318 = vld [vmem:[#allocation2 + $0x20] sm:$0xff]
    %v319 = vld [vmem:[#allocation2 + $0x28] sm:$0xff]
    %v320 = vld [vmem:[#allocation2 + $0x30] sm:$0xff]
    %v321 = vld [vmem:[#allocation2 + $0x38] sm:$0xff]
    %v322 = vld [vmem:[#allocation2 + $0x40] sm:$0xff]
    %v323 = vld [vmem:[#allocation2 + $0x48] sm:$0xff]
    %v324 = vld [vmem:[#allocation2 + $0x50] sm:$0xff]
    %v325 = vld [vmem:[#allocation2 + $0x58] sm:$0xff]
    %v326 = vld [vmem:[#allocation2 + $0x60] sm:$0xff]
    %v327 = vld [vmem:[#allocation2 + $0x68] sm:$0xff]
    %v328 = vld [vmem:[#allocation2 + $0x70] sm:$0xff]
    %v329 = vld [vmem:[#allocation2 + $0x78] sm:$0xff]
    %v330 = vld [vmem:[%s2] sm:$0x1]
    %v332 = vlaneseq
    %v333 = vshrl.u32 %v332, 7
    %v334 = vsub.s32 0, %v333
    %v335 = vrot.slane %v330, %v334
    %v337 = vadd.f32 %v314, %v335
    %v338 = vadd.f32 %v315, %v335
    %v339 = vadd.f32 %v316, %v335
    %v340 = vadd.f32 %v317, %v335
    %v341 = vadd.f32 %v318, %v335
    %v342 = vadd.f32 %v319, %v335
    %v343 = vadd.f32 %v320, %v335
    %v344 = vadd.f32 %v321, %v335
    %v345 = vadd.f32 %v322, %v335
    %v346 = vadd.f32 %v323, %v335
    %v347 = vadd.f32 %v324, %v335
    %v348 = vadd.f32 %v325, %v335
    %v349 = vadd.f32 %v326, %v335
    %v350 = vadd.f32 %v327, %v335
    %v351 = vadd.f32 %v328, %v335
    %v352 = vadd.f32 %v329, %v335
    %v353 = vmax.f32 %v337, 0.0
    %v354 = vmax.f32 %v338, 0.0
    %v355 = vmax.f32 %v339, 0.0
    %v356 = vmax.f32 %v340, 0.0
    %v357 = vmax.f32 %v341, 0.0
    %v358 = vmax.f32 %v342, 0.0
    %v359 = vmax.f32 %v343, 0.0
    %v360 = vmax.f32 %v344, 0.0
    %v361 = vmax.f32 %v345, 0.0
    %v362 = vmax.f32 %v346, 0.0
    %v363 = vmax.f32 %v347, 0.0
    %v364 = vmax.f32 %v348, 0.0
    %v365 = vmax.f32 %v349, 0.0
    %v366 = vmax.f32 %v350, 0.0
    %v367 = vmax.f32 %v351, 0.0
    %v368 = vmax.f32 %v352, 0.0
    %v369 = vpack.c.bf16 %v354, %v353
    %v370 = vpack.c.bf16 %v356, %v355
    %v371 = vpack.c.bf16 %v358, %v357
    %v372 = vpack.c.bf16 %v360, %v359
    %v373 = vpack.c.bf16 %v362, %v361
    %v374 = vpack.c.bf16 %v364, %v363
    %v375 = vpack.c.bf16 %v366, %v365
    %v376 = vpack.c.bf16 %v368, %v367
    %v377 = vld [vmem:[%s3] sm:$0xf]
    %v378 = vld [vmem:[%s3 + $0x4] sm:$0xf]
    %v379 = vld [vmem:[%s3 + $0x8] sm:$0xf]
    %v380 = vld [vmem:[%s3 + $0xc] sm:$0xf]
    %v381 = vld [vmem:[%s3 + $0x10] sm:$0xf]
    %v382 = vld [vmem:[%s3 + $0x14] sm:$0xf]
    %v383 = vld [vmem:[%s3 + $0x18] sm:$0xf]
    %v384 = vld [vmem:[%s3 + $0x1c] sm:$0xf]
    %v385 = vld [vmem:[%s3 + $0x20] sm:$0xf]
    %v386 = vld [vmem:[%s3 + $0x24] sm:$0xf]
    %v387 = vld [vmem:[%s3 + $0x28] sm:$0xf]
    %v388 = vld [vmem:[%s3 + $0x2c] sm:$0xf]
    %v389 = vld [vmem:[%s3 + $0x30] sm:$0xf]
    %v390 = vld [vmem:[%s3 + $0x34] sm:$0xf]
    %v391 = vld [vmem:[%s3 + $0x38] sm:$0xf]
    %v392 = vld [vmem:[%s3 + $0x3c] sm:$0xf]
    %v409 = vunpack.c.l.b16 %v377
    %v410 = vunpack.c.l.b16 %v378
    %v411 = vunpack.c.l.b16 %v379
    %v412 = vunpack.c.l.b16 %v380
    %v413 = vunpack.c.l.b16 %v381
    %v414 = vunpack.c.l.b16 %v382
    %v415 = vunpack.c.l.b16 %v383
    %v416 = vunpack.c.l.b16 %v384
    %v417 = vunpack.c.l.b16 %v385
    %v418 = vunpack.c.l.b16 %v386
    %v419 = vunpack.c.l.b16 %v387
    %v420 = vunpack.c.l.b16 %v388
    %v421 = vunpack.c.l.b16 %v389
    %v422 = vunpack.c.l.b16 %v390
    %v423 = vunpack.c.l.b16 %v391
    %v424 = vunpack.c.l.b16 %v392
    %v425 = vpack.c.b16 %v410, %v409
    %v426 = vpack.c.b16 %v412, %v411
    %v427 = vpack.c.b16 %v414, %v413
    %v428 = vpack.c.b16 %v416, %v415
    %v429 = vpack.c.b16 %v418, %v417
    %v430 = vpack.c.b16 %v420, %v419
    %v431 = vpack.c.b16 %v422, %v421
    %v432 = vpack.c.b16 %v424, %v423
    %441 = vmatprep.subr.bf16.mxu0 0
    %442 = vmatpush1.bf16.msra.mxu0 %v425
    %443 = vmatprep.subr.bf16.mxu0 0
    %444 = vmatpush1.bf16.msra.mxu0 %v426
    %445 = vmatprep.subr.bf16.mxu0 0
    %446 = vmatpush1.bf16.msra.mxu0 %v427
    %447 = vmatprep.subr.bf16.mxu0 0
    %448 = vmatpush1.bf16.msra.mxu0 %v428
    %449 = vmatprep.subr.bf16.mxu0 0
    %450 = vmatpush1.bf16.msra.mxu0 %v429
    %451 = vmatprep.subr.bf16.mxu0 0
    %452 = vmatpush1.bf16.msra.mxu0 %v430
    %453 = vmatprep.subr.bf16.mxu0 0
    %454 = vmatpush1.bf16.msra.mxu0 %v431
    %455 = vmatprep.subr.bf16.mxu0 0
    %456 = vmatpush1.bf16.msra.mxu0 %v432
    %457 = vmatprep.subr.bf16.mxu0 0
    %458 = vmatpush1.bf16.msra.mxu0 0
    %459 = vmatprep.subr.bf16.mxu0 0
    %460 = vmatpush1.bf16.msra.mxu0 0
    %461 = vmatprep.subr.bf16.mxu0 0
    %462 = vmatpush1.bf16.msra.mxu0 0
    %463 = vmatprep.subr.bf16.mxu0 0
    %464 = vmatpush1.bf16.msra.mxu0 0
    %465 = vmatprep.subr.bf16.mxu0 0
    %466 = vmatpush1.bf16.msra.mxu0 0
    %467 = vmatprep.subr.bf16.mxu0 0
    %468 = vmatpush1.bf16.msra.mxu0 0
    %469 = vmatprep.subr.bf16.mxu0 0
    %470 = vmatpush1.bf16.msra.mxu0 0
    %471 = vmatprep.subr.bf16.mxu0 0
    %472 = vmatpush1.bf16.msra.mxu0 0
    %473 = vmatprep.mubr.bf16.mxu0 0
    %474 = vmatmul.mubr.bf16.gmra.mrb[0].mxu0 %v369
    %v475 = vpop.f32.mrb[0].mxu0
    %v476 = vadd.f32 0.0, %v475
    %v477 = vpop.f32.mrb[0].mxu0
    %v478 = vpop.f32.mrb[0].mxu0
    %v479 = vadd.f32 0.0, %v478
    %v480 = vpop.f32.mrb[0].mxu0
    %481 = vmatprep.mubr.bf16.mxu0 0
    %482 = vmatmul.mubr.bf16.gmra.mrb[0].mxu0 %v370
    %v483 = vpop.f32.mrb[0].mxu0
    %v484 = vadd.f32 0.0, %v483
    %v485 = vpop.f32.mrb[0].mxu0
    %v486 = vpop.f32.mrb[0].mxu0
    %v487 = vadd.f32 0.0, %v486
    %v488 = vpop.f32.mrb[0].mxu0
    %489 = vmatprep.mubr.bf16.mxu0 0
    %490 = vmatmul.mubr.bf16.gmra.mrb[0].mxu0 %v371
    %v491 = vpop.f32.mrb[0].mxu0
    %v492 = vadd.f32 0.0, %v491
    %v493 = vpop.f32.mrb[0].mxu0
    %v494 = vpop.f32.mrb[0].mxu0
    %v495 = vadd.f32 0.0, %v494
    %v496 = vpop.f32.mrb[0].mxu0
    %497 = vmatprep.mubr.bf16.mxu0 0
    %498 = vmatmul.mubr.bf16.gmra.mrb[0].mxu0 %v372
    %v499 = vpop.f32.mrb[0].mxu0
    %v500 = vadd.f32 0.0, %v499
    %v501 = vpop.f32.mrb[0].mxu0
    %v502 = vpop.f32.mrb[0].mxu0
    %v503 = vadd.f32 0.0, %v502
    %v504 = vpop.f32.mrb[0].mxu0
    %505 = vmatprep.mubr.bf16.mxu0 0
    %506 = vmatmul.mubr.bf16.gmra.mrb[0].mxu0 %v373
    %v507 = vpop.f32.mrb[0].mxu0
    %v508 = vadd.f32 0.0, %v507
    %v509 = vpop.f32.mrb[0].mxu0
    %v510 = vpop.f32.mrb[0].mxu0
    %v511 = vadd.f32 0.0, %v510
    %v512 = vpop.f32.mrb[0].mxu0
    %513 = vmatprep.mubr.bf16.mxu0 0
    %514 = vmatmul.mubr.bf16.gmra.mrb[0].mxu0 %v374
    %v515 = vpop.f32.mrb[0].mxu0
    %v516 = vadd.f32 0.0, %v515
    %v517 = vpop.f32.mrb[0].mxu0
    %v518 = vpop.f32.mrb[0].mxu0
    %v519 = vadd.f32 0.0, %v518
    %v520 = vpop.f32.mrb[0].mxu0
    %521 = vmatprep.mubr.bf16.mxu0 0
    %522 = vmatmul.mubr.bf16.gmra.mrb[0].mxu0 %v375
    %v523 = vpop.f32.mrb[0].mxu0
    %v524 = vadd.f32 0.0, %v523
    %v525 = vpop.f32.mrb[0].mxu0
    %v526 = vpop.f32.mrb[0].mxu0
    %v527 = vadd.f32 0.0, %v526
    %v528 = vpop.f32.mrb[0].mxu0
    %529 = vmatprep.mubr.bf16.mxu0 0
    %530 = vmatmul.mubr.bf16.gmra.mrb[0].mxu0 %v376
    %v531 = vpop.f32.mrb[0].mxu0
    %v532 = vadd.f32 0.0, %v531
    %v533 = vpop.f32.mrb[0].mxu0
    %v534 = vpop.f32.mrb[0].mxu0
    %v535 = vadd.f32 0.0, %v534
    %v536 = vpop.f32.mrb[0].mxu0
    %537 = vdwg.mxu0
    %v538 = vpack.c.bf16 %v479, %v476
    %v539 = vpack.c.bf16 %v487, %v484
    %v540 = vpack.c.bf16 %v495, %v492
    %v541 = vpack.c.bf16 %v503, %v500
    %v542 = vpack.c.bf16 %v511, %v508
    %v543 = vpack.c.bf16 %v519, %v516
    %v544 = vpack.c.bf16 %v527, %v524
    %v545 = vpack.c.bf16 %v535, %v532
    %v554 = vunpack.c.l.b16 %v538
    %v555 = vunpack.c.h.b16 %v538
    %v556 = vunpack.c.l.b16 %v539
    %v557 = vunpack.c.h.b16 %v539
    %v558 = vunpack.c.l.b16 %v540
    %v559 = vunpack.c.h.b16 %v540
    %v560 = vunpack.c.l.b16 %v541
    %v561 = vunpack.c.h.b16 %v541
    %v562 = vunpack.c.l.b16 %v542
    %v563 = vunpack.c.h.b16 %v542
    %v564 = vunpack.c.l.b16 %v543
    %v565 = vunpack.c.h.b16 %v543
    %v566 = vunpack.c.l.b16 %v544
    %v567 = vunpack.c.h.b16 %v544
    %v568 = vunpack.c.l.b16 %v545
    %v569 = vunpack.c.h.b16 %v545
    %v570 = vpack.c.b16 %v554, %v554
    %v571 = vpack.c.b16 %v555, %v555
    %v572 = vpack.c.b16 %v556, %v556
    %v573 = vpack.c.b16 %v557, %v557
    %v574 = vpack.c.b16 %v558, %v558
    %v575 = vpack.c.b16 %v559, %v559
    %v576 = vpack.c.b16 %v560, %v560
    %v577 = vpack.c.b16 %v561, %v561
    %v578 = vpack.c.b16 %v562, %v562
    %v579 = vpack.c.b16 %v563, %v563
    %v580 = vpack.c.b16 %v564, %v564
    %v581 = vpack.c.b16 %v565, %v565
    %v582 = vpack.c.b16 %v566, %v566
    %v583 = vpack.c.b16 %v567, %v567
    %v584 = vpack.c.b16 %v568, %v568
    %v585 = vpack.c.b16 %v569, %v569
    %602 = vst [vmem:[%s4] sm:$0xf] %v570
    %603 = vst [vmem:[%s4 + $0x4] sm:$0xf] %v571
    %604 = vst [vmem:[%s4 + $0x8] sm:$0xf] %v572
    %605 = vst [vmem:[%s4 + $0xc] sm:$0xf] %v573
    %606 = vst [vmem:[%s4 + $0x10] sm:$0xf] %v574
    %607 = vst [vmem:[%s4 + $0x14] sm:$0xf] %v575
    %608 = vst [vmem:[%s4 + $0x18] sm:$0xf] %v576
    %609 = vst [vmem:[%s4 + $0x1c] sm:$0xf] %v577
    %610 = vst [vmem:[%s4 + $0x20] sm:$0xf] %v578
    %611 = vst [vmem:[%s4 + $0x24] sm:$0xf] %v579
    %612 = vst [vmem:[%s4 + $0x28] sm:$0xf] %v580
    %613 = vst [vmem:[%s4 + $0x2c] sm:$0xf] %v581
    %614 = vst [vmem:[%s4 + $0x30] sm:$0xf] %v582
    %615 = vst [vmem:[%s4 + $0x34] sm:$0xf] %v583
    %616 = vst [vmem:[%s4 + $0x38] sm:$0xf] %v584
    %617 = vst [vmem:[%s4 + $0x3c] sm:$0xf] %v585
  $region25: #{gnn_forward.2} parent=0 // pred_fallthru
    _
  // Predicated region
  $region26: #{gnn_forward.2} parent=0 // pred_check
    _
  $region27: #{gnn_forward.2} parent=0 // pred_check_branch
    %619 = sbr.rel (0) target = $region29
  $region28: #{gnn_forward.2} parent=0 // pred_region
    _
  $region29: #{gnn_forward.2} parent=0 // pred_fallthru
    _
  // Predicated region
  $region30: #{gnn_forward.2} parent=0 // pred_check
    _
  $region31: #{gnn_forward.2} parent=0 // pred_check_branch
    %621 = sbr.rel (0) target = $region33
  $region32: #{gnn_forward.2} parent=0 // pred_region
    _
  $region33: #{gnn_forward.2} parent=0 // pred_fallthru
    _

</llo_original>
